<compile_context>
chip_gen: v7x
topology: tpu7x:2x2x1
jax: 0.10.0
libtpu: 0.0.40
codegen_flags: <defaults>
</compile_context>

<pallas_src>
import jax
import jax.numpy as jnp
from jax import lax
from jax.experimental import pallas as pl
from jax.experimental.pallas import tpu as pltpu

K = 4        # kernel_size
STRIDE = 2
PAD = 1
EPS = 1e-5   # torch.nn.InstanceNorm2d default eps

# sub-pixel tables: for output phase p and tap t,
#   padded-input offset  d = _TAP_OFF[p][t]
#   transposed-conv kernel index k = _TAP_K[p][t]
# (same tables apply independently to H and W)
_TAP_OFF = ((0, 1), (1, 2))
_TAP_K   = ((3, 1), (2, 0))

_PHASES = ((0, 0), (0, 1), (1, 0), (1, 1))


def _pick_vmem_limit():
    """~70% of physical VMEM, capped at 96 MiB (keeps v7x within its 64 MiB)."""
    try:
        cap = int(pltpu.get_tpu_info().vmem_capacity_bytes)
        return min(96 * 1024 * 1024, int(cap * 0.7))
    except Exception:
        return 48 * 1024 * 1024


def upsampling_forward(x_nchw, w_ct, gamma, beta):
    """ConvTranspose2d(k=4, s=2, p=1, bias=False) + InstanceNorm2d(affine=True) + ReLU.

    x_nchw : (N, Cin, H, W) f32
    w_ct   : (Cin, Cout, K, K)  -- PyTorch ConvTranspose2d weight layout
    gamma, beta : (Cout,)
    returns (N, Cout, 2H, 2W) float32
    """
    N, Cin, H, W = x_nchw.shape
    Cout = w_ct.shape[1]
    Hp, Wp = H + 2, W + 2
    P = Hp * Wp                       # flattened padded-input length
    L = (H - 1) * Wp + W              # flattened conv-output length (incl. 2 junk cols/row)
    inv_cnt = 1.0 / float(4 * H * W)  # instance size = Hout*Wout = 4*H*W

    # Cout tile: 256 fills the v6e/v7x MXU; 128 matches v5e; else full Cout (always legal).
    if Cout % 256 == 0:
        ct = 256
    elif Cout % 128 == 0:
        ct = 128
    else:
        ct = Cout

    # ---------------- fused kernel (closes over static geometry) ----------------
    def kernel(x_ref, w_ref, gb_ref, mask_ref, o_ref):
        # x_ref   : (1, Cin, P)        bf16  flat padded input (one copy)
        # w_ref   : (4, ct, 4*Cin)     bf16  per-phase K-fused weight slabs
        # gb_ref  : (ct, 2)            f32   [gamma, beta]
        # mask_ref: (1, L)             f32   1.0 on valid columns, 0.0 on wrap columns
        # o_ref   : (1, 2, 2, ct, L)   bf16  phase-separated, channel-major output
        x2 = x_ref[0]                 # (Cin, P) bf16
        mask = mask_ref[...]          # (1, L)   f32

        s1 = jnp.zeros((o_ref.shape[3], 1), jnp.float32)
        s2 = jnp.zeros((o_ref.shape[3], 1), jnp.float32)
        ys = []
        # --- sub-pixel transposed conv: 4 phases, each one MXU matmul with K=4*Cin ---
        for idx, (ph, pw) in enumerate(_PHASES):
            taps = []
            for th in range(2):
                for tw in range(2):
                    s = _TAP_OFF[ph][th] * Wp + _TAP_OFF[pw][tw]
                    taps.append(x2[:, s:s + L])              # (Cin, L) shifted view (VMEM)
            xk = jnp.concatenate(taps, axis=0)               # (4*Cin, L) bf16
            y = jnp.dot(w_ref[idx], xk,
                        preferred_element_type=jnp.float32)  # (ct, L) f32
            # --- single-pass InstanceNorm statistics (junk columns masked out) ---
            ym = y * mask
            s1 = s1 + ym.sum(axis=-1, keepdims=True)
            s2 = s2 + (ym * y).sum(axis=-1, keepdims=True)
            ys.append(y)

        mean = s1 * inv_cnt                                  # (ct, 1)
        var = jnp.maximum(s2 * inv_cnt - mean * mean, 0.0)   # biased var (PyTorch IN)
        rstd = lax.rsqrt(var + EPS)
        scale = gb_ref[:, 0:1] * rstd
        shift = gb_ref[:, 1:2] - mean * scale

        # --- normalize + affine + ReLU, lane-dense bf16 stores ---
        for idx, (ph, pw) in enumerate(_PHASES):
            o_ref[0, ph, pw] = jnp.maximum(
                ys[idx] * scale + shift, 0.0).astype(o_ref.dtype)

    # ---------------- prep (XLA): single padded copy, flat; packed weights ----------------
    xpad = jnp.pad(x_nchw, ((0, 0), (0, 0), (1, 1), (1, 1)))
    xflat = xpad.reshape(N, Cin, P).astype(jnp.bfloat16)      # contiguous reshape, 1x copy

    wt = jnp.transpose(w_ct, (1, 0, 2, 3))                    # (Cout, Cin, K, K)
    slabs = []
    for ph in range(2):
        for pw in range(2):
            cols = [wt[:, :, _TAP_K[ph][th], _TAP_K[pw][tw]]
                    for th in range(2) for tw in range(2)]    # 4 x (Cout, Cin)
            slabs.append(jnp.concatenate(cols, axis=1))       # (Cout, 4*Cin)
    w_packed = jnp.stack(slabs, axis=0).astype(jnp.bfloat16)  # (4, Cout, 4*Cin)

    gb = jnp.stack([gamma, beta], axis=1).astype(jnp.float32)               # (Cout, 2)
    mask = ((jnp.arange(L) % Wp) < W).astype(jnp.float32).reshape(1, L)     # (1, L)

    out_ph = pl.pallas_call(
        kernel,
        out_shape=jax.ShapeDtypeStruct((N, 2, 2, Cout, L), jnp.bfloat16),
        grid_spec=pltpu.PrefetchScalarGridSpec(
            num_scalar_prefetch=0,
            grid=(N, Cout // ct),                     # Cout-tile axis innermost -> input stays resident
            in_specs=[
                pl.BlockSpec((1, Cin, P),      lambda n, j: (n, 0, 0)),
                pl.BlockSpec((4, ct, 4 * Cin), lambda n, j: (0, j, 0)),
                pl.BlockSpec((ct, 2),          lambda n, j: (j, 0)),
                pl.BlockSpec((1, L),           lambda n, j: (0, 0)),
            ],
            out_specs=pl.BlockSpec((1, 2, 2, ct, L), lambda n, j: (n, 0, 0, j, 0)),
        ),
        compiler_params=pltpu.CompilerParams(
            dimension_semantics=("parallel", "parallel"),
            vmem_limit_bytes=_pick_vmem_limit()),
    )(xflat, w_packed, gb, mask)

    # ---------------- phase interleave (bf16 read, f32 cast fused) ----------------
    out = jnp.pad(out_ph, ((0, 0), (0, 0), (0, 0), (0, 0), (0, H * Wp - L)))
    out = out.reshape(N, 2, 2, Cout, H, Wp)[..., :W]           # drop junk columns
    out = out.transpose(0, 3, 4, 1, 5, 2).reshape(N, Cout, 2 * H, 2 * W)
    return out.astype(jnp.float32)


# ---------------- pure-JAX reference (for self-check) ----------------

def reference_forward(x_nchw, w_ct, gamma, beta, conv_dtype=jnp.float32):
    xx = x_nchw.astype(conv_dtype)
    ww = jnp.transpose(w_ct, (1, 0, 2, 3))[:, :, ::-1, ::-1].astype(conv_dtype)  # (Cout,Cin,K,K)
    y = lax.conv_general_dilated(
        xx, ww, window_strides=(1, 1),
        padding=((K - 1 - PAD, K - 1 - PAD), (K - 1 - PAD, K - 1 - PAD)),
        lhs_dilation=(STRIDE, STRIDE),
        dimension_numbers=("NCHW", "OIHW", "NCHW"),
        preferred_element_type=jnp.float32)
    mean = jnp.mean(y, axis=(2, 3), keepdims=True)
    var = jnp.mean((y - mean) ** 2, axis=(2, 3), keepdims=True)
    out = (y - mean) * lax.rsqrt(var + EPS) * gamma[None, :, None, None] \
        + beta[None, :, None, None]
    return jnp.maximum(out, 0.0)


if __name__ == "__main__":
    key = jax.random.PRNGKey(0)
    k1, k2, k3, k4 = jax.random.split(key, 4)

    N, Cin, Cout, H, W = 2, 8, 16, 16, 16
    x = jax.random.normal(k1, (N, Cin, H, W), jnp.float32)
    w_ct = 0.1 * jax.random.normal(k2, (Cin, Cout, K, K), jnp.float32)   # ConvTranspose2d weight
    gamma = 1.0 + 0.1 * jax.random.normal(k3, (Cout,), jnp.float32)
    beta = 0.1 * jax.random.normal(k4, (Cout,), jnp.float32)

    out = jax.block_until_ready(upsampling_forward(x, w_ct, gamma, beta))
    assert out.shape == (N, Cout, STRIDE * H, STRIDE * W), out.shape
    assert bool(jnp.all(jnp.isfinite(out)))

    # check vs. a reference using the same bf16 conv operands (f32 accumulation);
    # tolerance covers the bf16 output rounding of the kernel.
    ref_bf16 = reference_forward(x, w_ct, gamma, beta, conv_dtype=jnp.bfloat16)
    err_b = float(jnp.max(jnp.abs(out - ref_bf16)))
    assert err_b < 4e-2, err_b

    # loose check vs. the full-f32 PyTorch-semantics reference (bf16 rounding only)
    ref_f32 = reference_forward(x, w_ct, gamma, beta, conv_dtype=jnp.float32)
    err_f = float(jnp.max(jnp.abs(out - ref_f32)))
    assert err_f < 8e-2, err_f

    print("KERNEL_OK")
</pallas_src>

<mosaic_0001>
module attributes {stable_mosaic.version = 11 : i64} {
  func.func @kernel(%arg0: i32, %arg1: i32, %arg2: memref<1x8x324xbf16, #tpu.memory_space<vmem>>, %arg3: memref<4x16x32xbf16, #tpu.memory_space<vmem>>, %arg4: memref<16x2xf32, #tpu.memory_space<vmem>>, %arg5: memref<1x286xf32, #tpu.memory_space<vmem>>, %arg6: memref<1x2x2x16x286xbf16, #tpu.memory_space<vmem>>) attributes {dimension_semantics = [#tpu.dimension_semantics<parallel>, #tpu.dimension_semantics<parallel>], iteration_bounds = array<i64: 2, 1>, scalar_prefetch = 0 : i64, scratch_operands = 0 : i64, tpu.core_type = #tpu.core_type<tc>, window_params = [{transform_indices = @transform_0, window_bounds = array<i64: 1, 8, 324>}, {transform_indices = @transform_1, window_bounds = array<i64: 4, 16, 32>}, {transform_indices = @transform_2, window_bounds = array<i64: 16, 2>}, {pipeline_mode = #tpu.pipeline_mode<synchronous>, transform_indices = @transform_3, window_bounds = array<i64: 1, 286>}, {transform_indices = @transform_4, window_bounds = array<i64: 1, 2, 2, 16, 286>}]} {
    %c0 = arith.constant 0 : index
    %c0_0 = arith.constant 0 : index
    %c0_1 = arith.constant 0 : index
    %0 = vector.load %arg2[%c0, %c0_0, %c0_1] : memref<1x8x324xbf16, #tpu.memory_space<vmem>>, vector<1x8x324xbf16>
    %1 = vector.shape_cast %0 : vector<1x8x324xbf16> to vector<8x324xbf16>
    %c0_2 = arith.constant 0 : index
    %c0_3 = arith.constant 0 : index
    %2 = vector.load %arg5[%c0_2, %c0_3] : memref<1x286xf32, #tpu.memory_space<vmem>>, vector<1x286xf32>
    %cst = arith.constant 0.000000e+00 : f32
    %3 = vector.broadcast %cst : f32 to vector<16x1xf32>
    %cst_4 = arith.constant 0.000000e+00 : f32
    %4 = vector.broadcast %cst_4 : f32 to vector<16x1xf32>
    %5 = vector.extract_strided_slice %1 {offsets = [0, 0], sizes = [8, 286], strides = [1, 1]} : vector<8x324xbf16> to vector<8x286xbf16>
    %6 = vector.extract_strided_slice %1 {offsets = [0, 1], sizes = [8, 286], strides = [1, 1]} : vector<8x324xbf16> to vector<8x286xbf16>
    %7 = vector.extract_strided_slice %1 {offsets = [0, 18], sizes = [8, 286], strides = [1, 1]} : vector<8x324xbf16> to vector<8x286xbf16>
    %8 = vector.extract_strided_slice %1 {offsets = [0, 19], sizes = [8, 286], strides = [1, 1]} : vector<8x324xbf16> to vector<8x286xbf16>
    %9 = tpu.concatenate %5, %6, %7, %8 in 0 : vector<8x286xbf16>, vector<8x286xbf16>, vector<8x286xbf16>, vector<8x286xbf16> -> vector<32x286xbf16>
    %c0_5 = arith.constant 0 : index
    %c0_6 = arith.constant 0 : index
    %c0_7 = arith.constant 0 : index
    %10 = vector.load %arg3[%c0_5, %c0_6, %c0_7] : memref<4x16x32xbf16, #tpu.memory_space<vmem>>, vector<1x16x32xbf16>
    %11 = vector.shape_cast %10 : vector<1x16x32xbf16> to vector<16x32xbf16>
    %cst_8 = arith.constant dense<0.000000e+00> : vector<16x286xf32>
    %12 = tpu.matmul %11, %9, %cst_8 {dimension_numbers = #tpu.dot_dimension_numbers<[1], [0], [0], [1], [0, 0, 1, 1], [], []>} : vector<16x32xbf16>, vector<32x286xbf16>, vector<16x286xf32> -> vector<16x286xf32>
    %13 = vector.broadcast %2 : vector<1x286xf32> to vector<16x286xf32>
    %14 = arith.mulf %12, %13 : vector<16x286xf32>
    %cst_9 = arith.constant dense<0.000000e+00> : vector<16xf32>
    %15 = vector.multi_reduction <add>, %14, %cst_9 [1] : vector<16x286xf32> to vector<16xf32>
    %16 = vector.shape_cast %15 : vector<16xf32> to vector<16x1xf32>
    %17 = arith.addf %3, %16 : vector<16x1xf32>
    %18 = arith.mulf %14, %12 : vector<16x286xf32>
    %cst_10 = arith.constant dense<0.000000e+00> : vector<16xf32>
    %19 = vector.multi_reduction <add>, %18, %cst_10 [1] : vector<16x286xf32> to vector<16xf32>
    %20 = vector.shape_cast %19 : vector<16xf32> to vector<16x1xf32>
    %21 = arith.addf %4, %20 : vector<16x1xf32>
    %22 = vector.extract_strided_slice %1 {offsets = [0, 1], sizes = [8, 286], strides = [1, 1]} : vector<8x324xbf16> to vector<8x286xbf16>
    %23 = vector.extract_strided_slice %1 {offsets = [0, 2], sizes = [8, 286], strides = [1, 1]} : vector<8x324xbf16> to vector<8x286xbf16>
    %24 = vector.extract_strided_slice %1 {offsets = [0, 19], sizes = [8, 286], strides = [1, 1]} : vector<8x324xbf16> to vector<8x286xbf16>
    %25 = vector.extract_strided_slice %1 {offsets = [0, 20], sizes = [8, 286], strides = [1, 1]} : vector<8x324xbf16> to vector<8x286xbf16>
    %26 = tpu.concatenate %22, %23, %24, %25 in 0 : vector<8x286xbf16>, vector<8x286xbf16>, vector<8x286xbf16>, vector<8x286xbf16> -> vector<32x286xbf16>
    %c1 = arith.constant 1 : index
    %c0_11 = arith.constant 0 : index
    %c0_12 = arith.constant 0 : index
    %27 = vector.load %arg3[%c1, %c0_11, %c0_12] : memref<4x16x32xbf16, #tpu.memory_space<vmem>>, vector<1x16x32xbf16>
    %28 = vector.shape_cast %27 : vector<1x16x32xbf16> to vector<16x32xbf16>
    %cst_13 = arith.constant dense<0.000000e+00> : vector<16x286xf32>
    %29 = tpu.matmul %28, %26, %cst_13 {dimension_numbers = #tpu.dot_dimension_numbers<[1], [0], [0], [1], [0, 0, 1, 1], [], []>} : vector<16x32xbf16>, vector<32x286xbf16>, vector<16x286xf32> -> vector<16x286xf32>
    %30 = vector.broadcast %2 : vector<1x286xf32> to vector<16x286xf32>
    %31 = arith.mulf %29, %30 : vector<16x286xf32>
    %cst_14 = arith.constant dense<0.000000e+00> : vector<16xf32>
    %32 = vector.multi_reduction <add>, %31, %cst_14 [1] : vector<16x286xf32> to vector<16xf32>
    %33 = vector.shape_cast %32 : vector<16xf32> to vector<16x1xf32>
    %34 = arith.addf %17, %33 : vector<16x1xf32>
    %35 = arith.mulf %31, %29 : vector<16x286xf32>
    %cst_15 = arith.constant dense<0.000000e+00> : vector<16xf32>
    %36 = vector.multi_reduction <add>, %35, %cst_15 [1] : vector<16x286xf32> to vector<16xf32>
    %37 = vector.shape_cast %36 : vector<16xf32> to vector<16x1xf32>
    %38 = arith.addf %21, %37 : vector<16x1xf32>
    %39 = vector.extract_strided_slice %1 {offsets = [0, 18], sizes = [8, 286], strides = [1, 1]} : vector<8x324xbf16> to vector<8x286xbf16>
    %40 = vector.extract_strided_slice %1 {offsets = [0, 19], sizes = [8, 286], strides = [1, 1]} : vector<8x324xbf16> to vector<8x286xbf16>
    %41 = vector.extract_strided_slice %1 {offsets = [0, 36], sizes = [8, 286], strides = [1, 1]} : vector<8x324xbf16> to vector<8x286xbf16>
    %42 = vector.extract_strided_slice %1 {offsets = [0, 37], sizes = [8, 286], strides = [1, 1]} : vector<8x324xbf16> to vector<8x286xbf16>
    %43 = tpu.concatenate %39, %40, %41, %42 in 0 : vector<8x286xbf16>, vector<8x286xbf16>, vector<8x286xbf16>, vector<8x286xbf16> -> vector<32x286xbf16>
    %c2 = arith.constant 2 : index
    %c0_16 = arith.constant 0 : index
    %c0_17 = arith.constant 0 : index
    %44 = vector.load %arg3[%c2, %c0_16, %c0_17] : memref<4x16x32xbf16, #tpu.memory_space<vmem>>, vector<1x16x32xbf16>
    %45 = vector.shape_cast %44 : vector<1x16x32xbf16> to vector<16x32xbf16>
    %cst_18 = arith.constant dense<0.000000e+00> : vector<16x286xf32>
    %46 = tpu.matmul %45, %43, %cst_18 {dimension_numbers = #tpu.dot_dimension_numbers<[1], [0], [0], [1], [0, 0, 1, 1], [], []>} : vector<16x32xbf16>, vector<32x286xbf16>, vector<16x286xf32> -> vector<16x286xf32>
    %47 = vector.broadcast %2 : vector<1x286xf32> to vector<16x286xf32>
    %48 = arith.mulf %46, %47 : vector<16x286xf32>
    %cst_19 = arith.constant dense<0.000000e+00> : vector<16xf32>
    %49 = vector.multi_reduction <add>, %48, %cst_19 [1] : vector<16x286xf32> to vector<16xf32>
    %50 = vector.shape_cast %49 : vector<16xf32> to vector<16x1xf32>
    %51 = arith.addf %34, %50 : vector<16x1xf32>
    %52 = arith.mulf %48, %46 : vector<16x286xf32>
    %cst_20 = arith.constant dense<0.000000e+00> : vector<16xf32>
    %53 = vector.multi_reduction <add>, %52, %cst_20 [1] : vector<16x286xf32> to vector<16xf32>
    %54 = vector.shape_cast %53 : vector<16xf32> to vector<16x1xf32>
    %55 = arith.addf %38, %54 : vector<16x1xf32>
    %56 = vector.extract_strided_slice %1 {offsets = [0, 19], sizes = [8, 286], strides = [1, 1]} : vector<8x324xbf16> to vector<8x286xbf16>
    %57 = vector.extract_strided_slice %1 {offsets = [0, 20], sizes = [8, 286], strides = [1, 1]} : vector<8x324xbf16> to vector<8x286xbf16>
    %58 = vector.extract_strided_slice %1 {offsets = [0, 37], sizes = [8, 286], strides = [1, 1]} : vector<8x324xbf16> to vector<8x286xbf16>
    %59 = vector.extract_strided_slice %1 {offsets = [0, 38], sizes = [8, 286], strides = [1, 1]} : vector<8x324xbf16> to vector<8x286xbf16>
    %60 = tpu.concatenate %56, %57, %58, %59 in 0 : vector<8x286xbf16>, vector<8x286xbf16>, vector<8x286xbf16>, vector<8x286xbf16> -> vector<32x286xbf16>
    %c3 = arith.constant 3 : index
    %c0_21 = arith.constant 0 : index
    %c0_22 = arith.constant 0 : index
    %61 = vector.load %arg3[%c3, %c0_21, %c0_22] : memref<4x16x32xbf16, #tpu.memory_space<vmem>>, vector<1x16x32xbf16>
    %62 = vector.shape_cast %61 : vector<1x16x32xbf16> to vector<16x32xbf16>
    %cst_23 = arith.constant dense<0.000000e+00> : vector<16x286xf32>
    %63 = tpu.matmul %62, %60, %cst_23 {dimension_numbers = #tpu.dot_dimension_numbers<[1], [0], [0], [1], [0, 0, 1, 1], [], []>} : vector<16x32xbf16>, vector<32x286xbf16>, vector<16x286xf32> -> vector<16x286xf32>
    %64 = vector.broadcast %2 : vector<1x286xf32> to vector<16x286xf32>
    %65 = arith.mulf %63, %64 : vector<16x286xf32>
    %cst_24 = arith.constant dense<0.000000e+00> : vector<16xf32>
    %66 = vector.multi_reduction <add>, %65, %cst_24 [1] : vector<16x286xf32> to vector<16xf32>
    %67 = vector.shape_cast %66 : vector<16xf32> to vector<16x1xf32>
    %68 = arith.addf %51, %67 : vector<16x1xf32>
    %69 = arith.mulf %65, %63 : vector<16x286xf32>
    %cst_25 = arith.constant dense<0.000000e+00> : vector<16xf32>
    %70 = vector.multi_reduction <add>, %69, %cst_25 [1] : vector<16x286xf32> to vector<16xf32>
    %71 = vector.shape_cast %70 : vector<16xf32> to vector<16x1xf32>
    %72 = arith.addf %55, %71 : vector<16x1xf32>
    %cst_26 = arith.constant 9.765625E-4 : f32
    %73 = vector.broadcast %cst_26 : f32 to vector<16x1xf32>
    %74 = arith.mulf %68, %73 : vector<16x1xf32>
    %cst_27 = arith.constant 9.765625E-4 : f32
    %75 = vector.broadcast %cst_27 : f32 to vector<16x1xf32>
    %76 = arith.mulf %72, %75 : vector<16x1xf32>
    %77 = arith.mulf %74, %74 : vector<16x1xf32>
    %78 = arith.subf %76, %77 : vector<16x1xf32>
    %cst_28 = arith.constant 0.000000e+00 : f32
    %79 = vector.broadcast %cst_28 : f32 to vector<16x1xf32>
    %80 = arith.maximumf %78, %79 : vector<16x1xf32>
    %cst_29 = arith.constant 9.99999974E-6 : f32
    %81 = vector.broadcast %cst_29 : f32 to vector<16x1xf32>
    %82 = arith.addf %80, %81 : vector<16x1xf32>
    %83 = math.rsqrt %82 : vector<16x1xf32>
    %c0_30 = arith.constant 0 : index
    %c0_31 = arith.constant 0 : index
    %84 = vector.load %arg4[%c0_30, %c0_31] : memref<16x2xf32, #tpu.memory_space<vmem>>, vector<16x1xf32>
    %85 = arith.mulf %84, %83 : vector<16x1xf32>
    %c0_32 = arith.constant 0 : index
    %c1_33 = arith.constant 1 : index
    %86 = vector.load %arg4[%c0_32, %c1_33] : memref<16x2xf32, #tpu.memory_space<vmem>>, vector<16x1xf32>
    %87 = arith.mulf %74, %85 : vector<16x1xf32>
    %88 = arith.subf %86, %87 : vector<16x1xf32>
    %89 = vector.broadcast %85 : vector<16x1xf32> to vector<16x286xf32>
    %90 = arith.mulf %12, %89 : vector<16x286xf32>
    %91 = vector.broadcast %88 : vector<16x1xf32> to vector<16x286xf32>
    %92 = arith.addf %90, %91 : vector<16x286xf32>
    %cst_34 = arith.constant 0.000000e+00 : f32
    %93 = vector.broadcast %cst_34 : f32 to vector<16x286xf32>
    %94 = arith.maximumf %92, %93 : vector<16x286xf32>
    %95 = arith.truncf %94 : vector<16x286xf32> to vector<16x286xbf16>
    %c0_35 = arith.constant 0 : index
    %c0_36 = arith.constant 0 : index
    %c0_37 = arith.constant 0 : index
    %c0_38 = arith.constant 0 : index
    %c0_39 = arith.constant 0 : index
    %96 = vector.load %arg6[%c0_35, %c0_36, %c0_37, %c0_38, %c0_39] : memref<1x2x2x16x286xbf16, #tpu.memory_space<vmem>>, vector<1x1x1x16x286xbf16>
    %97 = vector.shape_cast %96 : vector<1x1x1x16x286xbf16> to vector<16x286xbf16>
    %98 = vector.shape_cast %95 : vector<16x286xbf16> to vector<1x1x1x16x286xbf16>
    tpu.vector_store %arg6[%c0_35, %c0_36, %c0_37, %c0_38, %c0_39], %98 {strides = array<i32>} : memref<1x2x2x16x286xbf16, #tpu.memory_space<vmem>>, vector<1x1x1x16x286xbf16>,
    %99 = vector.broadcast %85 : vector<16x1xf32> to vector<16x286xf32>
    %100 = arith.mulf %29, %99 : vector<16x286xf32>
    %101 = vector.broadcast %88 : vector<16x1xf32> to vector<16x286xf32>
    %102 = arith.addf %100, %101 : vector<16x286xf32>
    %cst_40 = arith.constant 0.000000e+00 : f32
    %103 = vector.broadcast %cst_40 : f32 to vector<16x286xf32>
    %104 = arith.maximumf %102, %103 : vector<16x286xf32>
    %105 = arith.truncf %104 : vector<16x286xf32> to vector<16x286xbf16>
    %c0_41 = arith.constant 0 : index
    %c0_42 = arith.constant 0 : index
    %c1_43 = arith.constant 1 : index
    %c0_44 = arith.constant 0 : index
    %c0_45 = arith.constant 0 : index
    %106 = vector.load %arg6[%c0_41, %c0_42, %c1_43, %c0_44, %c0_45] : memref<1x2x2x16x286xbf16, #tpu.memory_space<vmem>>, vector<1x1x1x16x286xbf16>
    %107 = vector.shape_cast %106 : vector<1x1x1x16x286xbf16> to vector<16x286xbf16>
    %108 = vector.shape_cast %105 : vector<16x286xbf16> to vector<1x1x1x16x286xbf16>
    tpu.vector_store %arg6[%c0_41, %c0_42, %c1_43, %c0_44, %c0_45], %108 {strides = array<i32>} : memref<1x2x2x16x286xbf16, #tpu.memory_space<vmem>>, vector<1x1x1x16x286xbf16>,
    %109 = vector.broadcast %85 : vector<16x1xf32> to vector<16x286xf32>
    %110 = arith.mulf %46, %109 : vector<16x286xf32>
    %111 = vector.broadcast %88 : vector<16x1xf32> to vector<16x286xf32>
    %112 = arith.addf %110, %111 : vector<16x286xf32>
    %cst_46 = arith.constant 0.000000e+00 : f32
    %113 = vector.broadcast %cst_46 : f32 to vector<16x286xf32>
    %114 = arith.maximumf %112, %113 : vector<16x286xf32>
    %115 = arith.truncf %114 : vector<16x286xf32> to vector<16x286xbf16>
    %c0_47 = arith.constant 0 : index
    %c1_48 = arith.constant 1 : index
    %c0_49 = arith.constant 0 : index
    %c0_50 = arith.constant 0 : index
    %c0_51 = arith.constant 0 : index
    %116 = vector.load %arg6[%c0_47, %c1_48, %c0_49, %c0_50, %c0_51] : memref<1x2x2x16x286xbf16, #tpu.memory_space<vmem>>, vector<1x1x1x16x286xbf16>
    %117 = vector.shape_cast %116 : vector<1x1x1x16x286xbf16> to vector<16x286xbf16>
    %118 = vector.shape_cast %115 : vector<16x286xbf16> to vector<1x1x1x16x286xbf16>
    tpu.vector_store %arg6[%c0_47, %c1_48, %c0_49, %c0_50, %c0_51], %118 {strides = array<i32>} : memref<1x2x2x16x286xbf16, #tpu.memory_space<vmem>>, vector<1x1x1x16x286xbf16>,
    %119 = vector.broadcast %85 : vector<16x1xf32> to vector<16x286xf32>
    %120 = arith.mulf %63, %119 : vector<16x286xf32>
    %121 = vector.broadcast %88 : vector<16x1xf32> to vector<16x286xf32>
    %122 = arith.addf %120, %121 : vector<16x286xf32>
    %cst_52 = arith.constant 0.000000e+00 : f32
    %123 = vector.broadcast %cst_52 : f32 to vector<16x286xf32>
    %124 = arith.maximumf %122, %123 : vector<16x286xf32>
    %125 = arith.truncf %124 : vector<16x286xf32> to vector<16x286xbf16>
    %c0_53 = arith.constant 0 : index
    %c1_54 = arith.constant 1 : index
    %c1_55 = arith.constant 1 : index
    %c0_56 = arith.constant 0 : index
    %c0_57 = arith.constant 0 : index
    %126 = vector.load %arg6[%c0_53, %c1_54, %c1_55, %c0_56, %c0_57] : memref<1x2x2x16x286xbf16, #tpu.memory_space<vmem>>, vector<1x1x1x16x286xbf16>
    %127 = vector.shape_cast %126 : vector<1x1x1x16x286xbf16> to vector<16x286xbf16>
    %128 = vector.shape_cast %125 : vector<16x286xbf16> to vector<1x1x1x16x286xbf16>
    tpu.vector_store %arg6[%c0_53, %c1_54, %c1_55, %c0_56, %c0_57], %128 {strides = array<i32>} : memref<1x2x2x16x286xbf16, #tpu.memory_space<vmem>>, vector<1x1x1x16x286xbf16>,
    return
  }
  func.func @transform_0(%arg0: i32, %arg1: i32) -> (i32, i32, i32) {
    %c0_i32 = arith.constant 0 : i32
    %c0_i32_0 = arith.constant 0 : i32
    %c0_i32_1 = arith.constant 0 : i32
    return %arg0, %c0_i32, %c0_i32_0 : i32, i32, i32
  }
  func.func @transform_1(%arg0: i32, %arg1: i32) -> (i32, i32, i32) {
    %c0_i32 = arith.constant 0 : i32
    %c0_i32_0 = arith.constant 0 : i32
    %c0_i32_1 = arith.constant 0 : i32
    return %c0_i32, %arg1, %c0_i32_0 : i32, i32, i32
  }
  func.func @transform_2(%arg0: i32, %arg1: i32) -> (i32, i32) {
    %c0_i32 = arith.constant 0 : i32
    %c0_i32_0 = arith.constant 0 : i32
    return %arg1, %c0_i32 : i32, i32
  }
  func.func @transform_3(%arg0: i32, %arg1: i32) -> (i32, i32) {
    %c0_i32 = arith.constant 0 : i32
    %c0_i32_0 = arith.constant 0 : i32
    %c0_i32_1 = arith.constant 0 : i32
    return %c0_i32, %c0_i32_0 : i32, i32
  }
  func.func @transform_4(%arg0: i32, %arg1: i32) -> (i32, i32, i32, i32, i32) {
    %c0_i32 = arith.constant 0 : i32
    %c0_i32_0 = arith.constant 0 : i32
    %c0_i32_1 = arith.constant 0 : i32
    %c0_i32_2 = arith.constant 0 : i32
    return %arg0, %c0_i32, %c0_i32_0, %arg1, %c0_i32_1 : i32, i32, i32, i32, i32
  }
}

</mosaic_0001>

<llo_original>
// kernel: tpu_custom_call.1
$region0: #{tpu_custom_call.1}
  #allocation0 [shape = 'u32[]', space=smem, size = 0x4, offset = 0x4, fixed_abs, tag = 'smem constant byte address 0x4 - core index']
  #allocation1 [shape = 'u32[144,128]{1,0:T(1,128)}', space=vmem, size = 0x12000, scoped, tag = 'internal scratch']
  %s0 = inlined_call_operand.hbm [shape: bf16[2,8,324], index: 0, kind: input, shape index: {}]
  %s1 = inlined_call_operand.hbm [shape: bf16[4,16,32], index: 1, kind: input, shape index: {}]
  %s2 = inlined_call_operand.vmem [shape: f32[16,2], index: 2, kind: input, shape index: {}]
  %s3 = inlined_call_operand.vmem [shape: f32[1,286], index: 3, kind: input, shape index: {}]
  %s4 = inlined_call_operand.hbm [shape: bf16[2,2,2,16,286], index: 4, kind: output, shape index: {}]
  %s5 = sld [smem:[#allocation0]]
  $region57: #{tpu_custom_call.1} parent=0
    _
  %s7 = ssub.s32 1, %s5
  %s8 = scalar_select 0, %s7, %s5
  $region1: #{tpu_custom_call.1} parent=0
    #allocation2 [shape = 'u8[12288]{0}', space=vmem, size = 0x3000, scoped, tag = 'input window, operand 0']
    #allocation3 [shape = 's32[2]{0}', space=sflag, size = 0x8, scoped, tag = 'scoped memory for tpu_custom_call.1']
    #allocation4 [shape = 's32[2]{0}', space=sflag, size = 0x8, scoped, tag = 'scoped memory for tpu_custom_call.1']
    #allocation5 [shape = 'u8[16384]{0}', space=vmem, size = 0x4000, scoped, tag = 'input window, operand 1, single buffered']
    #allocation6 [shape = 's32[1]{0}', space=sflag, size = 0x4, scoped, tag = 'scoped memory for tpu_custom_call.1']
    #allocation7 [shape = 'u8[98304]{0}', space=vmem, size = 0x18000, scoped, tag = 'output window, operand 0']
    %9 = vsyncpa [#allocation3], 0
    %s10 = scalar_lea.sflag [#allocation3], 1
    %11 = vsyncpa %s10, 0
    %12 = vsyncpa [#allocation6], 0
    %13 = vsyncpa [#allocation4], 0
    %s14 = scalar_lea.sflag [#allocation4], 1
    %15 = vsyncpa %s14, 0
    loop: start=0, step=1, limit=4
    $region2: #{tpu_custom_call.1} parent=1 // loop_pre_header
      _
    $region3: #{tpu_custom_call.1} parent=1 // loop_header
      %s17 = sphi 0, %s21
      %p18 = scmp.ge.s32.totalorder %s17, 4
      %s24 = sphi 0, %s36
      %s25 = sphi 0, %s32
      %s26 = sphi 0, %s24
      %s27 = sphi 0, %s25
      %s28 = sphi 0, %s26
      %s29 = sphi 0, %s27
      %s39 = sphi 0, %s41
      %s42 = sphi 0, %s39
      %s43 = sphi 0, %s42
      %s59 = sphi 0, %s43
      %s65 = sphi 0, %s67
      %s68 = sphi 0, %s65
      %s69 = sphi 0, %s68
      %s85 = sphi 0, %s69
      %s91 = sphi 0, %s93
      %s94 = sphi 0, %s91
      %s95 = sphi 0, %s94
      %s111 = sphi 0, %s95
      %s115 = sphi 0, %s115
      %s117 = sphi 0, %s115
      %s118 = sphi 0, %s117
      %s132 = sphi 0, %s118
      %s140 = sphi 0, %s142
      %s143 = sphi 0, %s140
      %s144 = sphi 0, %s143
      %s160 = sphi 0, %s144
    $region4: #{tpu_custom_call.1} parent=1 // loop_header_branch
      %20 = sbr.rel (%p18) target = $region8
    $region5: #{tpu_custom_call.1} parent=1 // loop_body
      %s22 = ssub.s32 %s17, 1
      %s23 = ssub.s32 %s17, 2
      %s30 = sadd.s32 1, %s25
      %p31 = scmp.ge.s32.totalorder %s30, 1
      %s32 = scalar_select %p31, 0, %s30
      %s33 = sadd.s32 1, %s24
      %s34 = scalar_select %p31, %s33, %s24
      %p35 = scmp.ge.s32.totalorder %s34, 2
      %s36 = scalar_select %p35, 0, %s34
      %s37 = ssub.s32 %s24, %s36
      %p38 = scmp.eq.s32.totalorder %s37, 0
      %s40 = sadd.s32 %s39, 1
      %s41 = scalar_select %p38, %s39, %s40
      %p44 = pneg %p38
      %p45 = scmp.eq.s32.totalorder %s17, 1
      %p46 = por %p44, %p45
      %p47 = scmp.ne.s32.totalorder %s39, %s42
      %p48 = scmp.eq.s32.totalorder %s17, 0
      %p49 = por %p47, %p48
      %p50 = scmp.ne.s32.totalorder %s39, %s42
      %p51 = scmp.eq.s32.totalorder %s22, 1
      %p52 = por %p50, %p51
      %p53 = scmp.ne.s32.totalorder %s42, %s43
      %p54 = scmp.eq.s32.totalorder %s22, 0
      %p55 = por %p53, %p54
      %p56 = scmp.ne.s32.totalorder %s42, %s43
      %p57 = scmp.eq.s32.totalorder %s23, 1
      %p58 = por %p56, %p57
      %p60 = scmp.ne.s32.totalorder %s43, %s59
      %p61 = scmp.eq.s32.totalorder %s23, 0
      %p62 = por %p60, %p61
      %s63 = ssub.s32 %s25, %s32
      %p64 = scmp.eq.s32.totalorder %s63, 0
      %s66 = sadd.s32 %s65, 1
      %s67 = scalar_select %p64, %s65, %s66
      %p70 = pneg %p64
      %p71 = scmp.eq.s32.totalorder %s17, 1
      %p72 = por %p70, %p71
      %p73 = scmp.ne.s32.totalorder %s65, %s68
      %p74 = scmp.eq.s32.totalorder %s17, 0
      %p75 = por %p73, %p74
      %p76 = scmp.ne.s32.totalorder %s65, %s68
      %p77 = scmp.eq.s32.totalorder %s22, 1
      %p78 = por %p76, %p77
      %p79 = scmp.ne.s32.totalorder %s68, %s69
      %p80 = scmp.eq.s32.totalorder %s22, 0
      %p81 = por %p79, %p80
      %p82 = scmp.ne.s32.totalorder %s68, %s69
      %p83 = scmp.eq.s32.totalorder %s23, 1
      %p84 = por %p82, %p83
      %p86 = scmp.ne.s32.totalorder %s69, %s85
      %p87 = scmp.eq.s32.totalorder %s23, 0
      %p88 = por %p86, %p87
      %s89 = ssub.s32 %s25, %s32
      %p90 = scmp.eq.s32.totalorder %s89, 0
      %s92 = sadd.s32 %s91, 1
      %s93 = scalar_select %p90, %s91, %s92
      %p96 = pneg %p90
      %p97 = scmp.eq.s32.totalorder %s17, 1
      %p98 = por %p96, %p97
      %p99 = scmp.ne.s32.totalorder %s91, %s94
      %p100 = scmp.eq.s32.totalorder %s17, 0
      %p101 = por %p99, %p100
      %p102 = scmp.ne.s32.totalorder %s91, %s94
      %p103 = scmp.eq.s32.totalorder %s22, 1
      %p104 = por %p102, %p103
      %p105 = scmp.ne.s32.totalorder %s94, %s95
      %p106 = scmp.eq.s32.totalorder %s22, 0
      %p107 = por %p105, %p106
      %p108 = scmp.ne.s32.totalorder %s94, %s95
      %p109 = scmp.eq.s32.totalorder %s23, 1
      %p110 = por %p108, %p109
      %p112 = scmp.ne.s32.totalorder %s95, %s111
      %p113 = scmp.eq.s32.totalorder %s23, 0
      %p114 = por %p112, %p113
      %s116 = sadd.s32 %s115, 1
      %p119 = scmp.eq.s32.totalorder %s17, 1
      %p120 = scmp.ne.s32.totalorder %s115, %s117
      %p121 = scmp.eq.s32.totalorder %s17, 0
      %p122 = por %p120, %p121
      %p123 = scmp.ne.s32.totalorder %s115, %s117
      %p124 = scmp.eq.s32.totalorder %s22, 1
      %p125 = por %p123, %p124
      %p126 = scmp.ne.s32.totalorder %s117, %s118
      %p127 = scmp.eq.s32.totalorder %s22, 0
      %p128 = por %p126, %p127
      %p129 = scmp.ne.s32.totalorder %s117, %s118
      %p130 = scmp.eq.s32.totalorder %s23, 1
      %p131 = por %p129, %p130
      %p133 = scmp.ne.s32.totalorder %s118, %s132
      %p134 = scmp.eq.s32.totalorder %s23, 0
      %p135 = por %p133, %p134
      %s136 = ssub.s32 %s24, %s36
      %s137 = ssub.s32 %s25, %s32
      %s138 = sor.u32 %s136, %s137
      %p139 = scmp.eq.s32.totalorder %s138, 0
      %s141 = sadd.s32 %s140, 1
      %s142 = scalar_select %p139, %s140, %s141
      %p145 = pneg %p139
      %p146 = scmp.eq.s32.totalorder %s17, 1
      %p147 = por %p145, %p146
      %p148 = scmp.ne.s32.totalorder %s140, %s143
      %p149 = scmp.eq.s32.totalorder %s17, 0
      %p150 = por %p148, %p149
      %p151 = scmp.ne.s32.totalorder %s140, %s143
      %p152 = scmp.eq.s32.totalorder %s22, 1
      %p153 = por %p151, %p152
      %p154 = scmp.ne.s32.totalorder %s143, %s144
      %p155 = scmp.eq.s32.totalorder %s22, 0
      %p156 = por %p154, %p155
      %p157 = scmp.ne.s32.totalorder %s143, %s144
      %p158 = scmp.eq.s32.totalorder %s23, 1
      %p159 = por %p157, %p158
      %p161 = scmp.ne.s32.totalorder %s144, %s160
      %p162 = scmp.eq.s32.totalorder %s23, 0
      %p163 = por %p161, %p162
      %p164 = scmp.le.s32.totalorder 1, %s17
      %p165 = scmp.lt.s32.totalorder %s17, 3
      %p166 = pnand %p164, %p165
      %p167 = pneg %p166
      // Predicated region
      $region9: #{tpu_custom_call.1} parent=5 // pred_check
        _
      $region10: #{tpu_custom_call.1} parent=5 // pred_check_branch
        %169 = sbr.rel (%p166) target = $region12
      $region11: #{tpu_custom_call.1} parent=5 // pred_region
        %s170 = ssub.s32 %s17, 1
        // Predicated region
        $region13: #{tpu_custom_call.1} parent=11 // pred_check
          %p171 = pneg %p81
        $region14: #{tpu_custom_call.1} parent=11 // pred_check_branch
          %173 = sbr.rel (%p171) target = $region16
        $region15: #{tpu_custom_call.1} parent=11 // pred_region
          %s174 = smul.u32 2, %s27
          %s176 = ssub.s32 512, 512
          %177 = vsyncadd [#allocation6], %s176
          %s178 = smul.addr %s174, 64
          %s179 = scalar_lea.hbm %s1, %s178
          %s180 = sshll.u32 [#allocation5], 4
          %s181 = int_to_ptr.vmem [resolvable:$true] %s180
          %186 = dma.hbm_to_vmem [thread:$0]  %s179, 512, %s181, [#allocation6], 64, 64, 4
        $region16: #{tpu_custom_call.1} parent=11 // pred_fallthru
          _
        // Predicated region
        $region17: #{tpu_custom_call.1} parent=11 // pred_check
          %p187 = pneg %p107
        $region18: #{tpu_custom_call.1} parent=11 // pred_check_branch
          %189 = sbr.rel (%p187) target = $region20
        $region19: #{tpu_custom_call.1} parent=11 // pred_region
          %s190 = smul.u32 2, %s27
          %p191 = scmp.lt.s32.totalorder %s190, 1
          %s192 = scalar_select %p191, %s190, 1
          %s193 = smul.addr %s192, 8
          %s194 = scalar_lea.vmem %s2, %s193
          %s195 = smul.u32 2, %s27
        $region20: #{tpu_custom_call.1} parent=11 // pred_fallthru
          _
        // Predicated region
        $region21: #{tpu_custom_call.1} parent=11 // pred_check
          %p196 = pneg %p128
        $region22: #{tpu_custom_call.1} parent=11 // pred_check_branch
          %198 = sbr.rel (%p196) target = $region24
        $region23: #{tpu_custom_call.1} parent=11 // pred_region
          _
        $region24: #{tpu_custom_call.1} parent=11 // pred_fallthru
          _
      $region12: #{tpu_custom_call.1} parent=5 // pred_fallthru
        _
      %p199 = scmp.lt.s32.totalorder %s17, 2
      // Predicated region
      $region25: #{tpu_custom_call.1} parent=5 // pred_check
        %p200 = pneg %p199
      $region26: #{tpu_custom_call.1} parent=5 // pred_check_branch
        %202 = sbr.rel (%p200) target = $region28
      $region27: #{tpu_custom_call.1} parent=5 // pred_region
        // Predicated region
        $region29: #{tpu_custom_call.1} parent=27 // pred_check
          %p203 = pneg %p49
        $region30: #{tpu_custom_call.1} parent=27 // pred_check_branch
          %205 = sbr.rel (%p203) target = $region32
        $region31: #{tpu_custom_call.1} parent=27 // pred_region
          %s206 = sand.u32 %s39, 1
          %s207 = scalar_lea.sflag [#allocation3], %s206
          %s208 = sand.u32 %s39, 1
          %s209 = smul.addr %s208, 12
          %s210 = scalar_lea.vmem [#allocation2], %s209
          %s212 = ssub.s32 192, 192
          %213 = vsyncadd %s207, %s212
          %s214 = smul.addr %s24, 3
          %s215 = smul.addr %s214, 64
          %s216 = scalar_lea.hbm %s0, %s215
          %s218 = sshll.u32 %s210, 4
          %s219 = int_to_ptr.vmem [resolvable:$true] %s218
          %221 = dma.hbm_to_vmem [thread:$0]  %s216, 192, %s219, %s207
        $region32: #{tpu_custom_call.1} parent=27 // pred_fallthru
          _
      $region28: #{tpu_custom_call.1} parent=5 // pred_fallthru
        _
      %p222 = scmp.le.s32.totalorder 1, %s17
      %p223 = scmp.lt.s32.totalorder %s17, 3
      %p224 = pnand %p222, %p223
      %p225 = pneg %p224
      // Predicated region
      $region33: #{tpu_custom_call.1} parent=5 // pred_check
        _
      $region34: #{tpu_custom_call.1} parent=5 // pred_check_branch
        %227 = sbr.rel (%p224) target = $region36
      $region35: #{tpu_custom_call.1} parent=5 // pred_region
        %s228 = ssub.s32 %s17, 1
        %s229 = sand.u32 %s42, 1
        %s230 = scalar_lea.sflag [#allocation3], %s229
        %s231 = sand.u32 %s42, 1
        %s232 = smul.addr %s231, 12
        %s233 = scalar_lea.vmem [#allocation2], %s232
        // Predicated region
        $region37: #{tpu_custom_call.1} parent=35 // pred_check
          %p234 = pneg %p55
        $region38: #{tpu_custom_call.1} parent=35 // pred_check_branch
          %236 = sbr.rel (%p234) target = $region40
        $region39: #{tpu_custom_call.1} parent=35 // pred_region
          %237 = dma.done %s230, 192
        $region40: #{tpu_custom_call.1} parent=35 // pred_fallthru
          _
        // Predicated region
        $region41: #{tpu_custom_call.1} parent=35 // pred_check
          %p238 = pneg %p81
        $region42: #{tpu_custom_call.1} parent=35 // pred_check_branch
          %240 = sbr.rel (%p238) target = $region44
        $region43: #{tpu_custom_call.1} parent=35 // pred_region
          %241 = dma.done [#allocation6], 512
        $region44: #{tpu_custom_call.1} parent=35 // pred_fallthru
          _
        %s242 = sand.u32 %s42, 1
        %s243 = scalar_lea.sflag [#allocation3], %s242
        %s244 = sand.u32 %s42, 1
        %s245 = smul.addr %s244, 12
        %s246 = scalar_lea.vmem [#allocation2], %s245
        %p247 = pneg %p55
        %p248 = pneg %p52
        %p249 = pneg %p81
        %p250 = pneg %p78
        %s251 = smul.u32 2, %s27
        %p252 = scmp.lt.s32.totalorder %s251, 1
        %s253 = scalar_select %p252, %s251, 1
        %s254 = smul.addr %s253, 8
        %s255 = scalar_lea.vmem %s2, %s254
        %p256 = pneg %p107
        %p257 = pneg %p104
        %p258 = pneg %p128
        %p259 = pneg %p125
        %p260 = pneg %p156
        %p261 = pneg %p153
        %s262 = sand.u32 %s143, 1
        %s263 = scalar_lea.sflag [#allocation4], %s262
        %s264 = sand.u32 %s143, 1
        %s265 = smul.addr %s264, 96
        %s266 = scalar_lea.vmem [#allocation7], %s265
        %s267 = smul.u32 2, %s27
        %s268 = smul.u32 2, %s27
        %p269 = scmp.lt.s32.totalorder %s268, 1
        %s270 = scalar_select %p269, %s268, 1
        %s271 = smul.addr %s270, 8
        %s272 = scalar_lea.vmem %s2, %s271
        %s273 = smul.u32 2, %s27
        %s274 = smul.u32 2, %s27
        %v276 = vld [vmem:[%s233] sm:$0xff]
        %v277 = vld [vmem:[%s233 + $0x8] sm:$0xf]
        %v278 = vld [vmem:[%s3] sm:$0x7]
        %v281 = vunpack.c.l.b16 %v276
        %v282 = vunpack.c.h.b16 %v276
        %v283 = vunpack.c.l.b16 %v277
        %v284 = vpack.c.b16 %v281, %v281
        %v285 = vpack.c.b16 %v282, %v282
        %v286 = vpack.c.b16 %v283, %v283
        %287 = vrot.lane.b32.xlu0 %v284, 127
        %v288 = vpop.permute.xlu0 %287
        %289 = vrot.lane.b32.xlu0 %v285, 127
        %v290 = vpop.permute.xlu0 %289
        %291 = vrot.lane.b32.xlu0 %v286, 127
        %v292 = vpop.permute.xlu0 %291
        %vm293 = vcmask 1039360
        %v294 = vsel %vm293, %v288, %v290
        %v295 = vsel %vm293, %v290, %v292
        %296 = vrot.lane.b32.xlu0 %v284, 110
        %v297 = vpop.permute.xlu0 %296
        %298 = vrot.lane.b32.xlu0 %v285, 110
        %v299 = vpop.permute.xlu0 %298
        %300 = vrot.lane.b32.xlu0 %v286, 110
        %v301 = vpop.permute.xlu0 %300
        %vm302 = vcmask 900096
        %v303 = vsel %vm302, %v297, %v299
        %v304 = vsel %vm302, %v299, %v301
        %305 = vrot.lane.b32.xlu0 %v284, 109
        %v306 = vpop.permute.xlu0 %305
        %307 = vrot.lane.b32.xlu0 %v285, 109
        %v308 = vpop.permute.xlu0 %307
        %309 = vrot.lane.b32.xlu0 %v286, 109
        %v310 = vpop.permute.xlu0 %309
        %vm311 = vcmask 891904
        %v312 = vsel %vm311, %v306, %v308
        %v313 = vsel %vm311, %v308, %v310
        %vm314 = vcmask 1043456
        %v317 = vsel %vm314, %v284, %v294
        %v321 = vsel %vm314, %v285, %v295
        %v325 = vsel %vm314, %v286, %v292
        %v329 = vsel %vm314, %v303, %v312
        %v333 = vsel %vm314, %v304, %v313
        %v337 = vsel %vm314, %v301, %v310
        %v339 = vld [vmem:[#allocation5] sm:$0xf]
        %v340 = vld [vmem:[#allocation5 + $0x4] sm:$0xf]
        %v343 = vunpack.c.l.b16 %v339
        %v344 = vunpack.c.l.b16 %v340
        %v345 = vpack.c.b16 %v344, %v343
        %vm346 = vcmask 261120
        %v348 = vsel %vm346, %v345, 0
        %350 = vmatprep.subr.bf16.mxu0 %v321
        %351 = vmatpush1.bf16.msra.mxu0 %v317
        %352 = vmatprep.subr.bf16.mxu0 %v333
        %353 = vmatpush1.bf16.msra.mxu0 %v329
        %354 = vmatprep.subr.bf16.mxu0 0
        %355 = vmatpush1.bf16.msra.mxu0 0
        %356 = vmatprep.subr.bf16.mxu0 0
        %357 = vmatpush1.bf16.msra.mxu0 0
        %358 = vmatprep.subr.bf16.mxu0 0
        %359 = vmatpush1.bf16.msra.mxu0 0
        %360 = vmatprep.subr.bf16.mxu0 0
        %361 = vmatpush1.bf16.msra.mxu0 0
        %362 = vmatprep.subr.bf16.mxu0 0
        %363 = vmatpush1.bf16.msra.mxu0 0
        %364 = vmatprep.subr.bf16.mxu0 0
        %365 = vmatpush1.bf16.msra.mxu0 0
        %366 = vmatprep.subr.bf16.mxu0 0
        %367 = vmatpush1.bf16.msra.mxu0 0
        %368 = vmatprep.subr.bf16.mxu0 0
        %369 = vmatpush1.bf16.msra.mxu0 0
        %370 = vmatprep.subr.bf16.mxu0 0
        %371 = vmatpush1.bf16.msra.mxu0 0
        %372 = vmatprep.subr.bf16.mxu0 0
        %373 = vmatpush1.bf16.msra.mxu0 0
        %374 = vmatprep.subr.bf16.mxu0 0
        %375 = vmatpush1.bf16.msra.mxu0 0
        %376 = vmatprep.subr.bf16.mxu0 0
        %377 = vmatpush1.bf16.msra.mxu0 0
        %378 = vmatprep.subr.bf16.mxu0 0
        %379 = vmatpush1.bf16.msra.mxu0 0
        %380 = vmatprep.subr.bf16.mxu0 0
        %381 = vmatpush1.bf16.msra.mxu0 0
        %382 = vmatprep.mubr.bf16.mxu0 0
        %383 = vmatmul.mubr.bf16.gmra.mrb[0].mxu0 %v348
        %v384 = vpop.f32.mrb[0].mxu0
        %v385 = vadd.f32 0.0, %v384
        %v386 = vpop.f32.mrb[0].mxu0
        %v387 = vadd.f32 0.0, %v386
        %v388 = vpop.f32.mrb[0].mxu0
        %v389 = vadd.f32 0.0, %v388
        %v390 = vpop.f32.mrb[0].mxu0
        %v391 = vadd.f32 0.0, %v390
        %392 = vdwg.mxu0
        %393 = vmatprep.subr.bf16.mxu0 0
        %394 = vmatpush1.bf16.msra.mxu0 %v325
        %395 = vmatprep.subr.bf16.mxu0 0
        %396 = vmatpush1.bf16.msra.mxu0 %v337
        %397 = vmatprep.subr.bf16.mxu0 0
        %398 = vmatpush1.bf16.msra.mxu0 0
        %399 = vmatprep.subr.bf16.mxu0 0
        %400 = vmatpush1.bf16.msra.mxu0 0
        %401 = vmatprep.subr.bf16.mxu0 0
        %402 = vmatpush1.bf16.msra.mxu0 0
        %403 = vmatprep.subr.bf16.mxu0 0
        %404 = vmatpush1.bf16.msra.mxu0 0
        %405 = vmatprep.subr.bf16.mxu0 0
        %406 = vmatpush1.bf16.msra.mxu0 0
        %407 = vmatprep.subr.bf16.mxu0 0
        %408 = vmatpush1.bf16.msra.mxu0 0
        %409 = vmatprep.subr.bf16.mxu0 0
        %410 = vmatpush1.bf16.msra.mxu0 0
        %411 = vmatprep.subr.bf16.mxu0 0
        %412 = vmatpush1.bf16.msra.mxu0 0
        %413 = vmatprep.subr.bf16.mxu0 0
        %414 = vmatpush1.bf16.msra.mxu0 0
        %415 = vmatprep.subr.bf16.mxu0 0
        %416 = vmatpush1.bf16.msra.mxu0 0
        %417 = vmatprep.subr.bf16.mxu0 0
        %418 = vmatpush1.bf16.msra.mxu0 0
        %419 = vmatprep.subr.bf16.mxu0 0
        %420 = vmatpush1.bf16.msra.mxu0 0
        %421 = vmatprep.subr.bf16.mxu0 0
        %422 = vmatpush1.bf16.msra.mxu0 0
        %423 = vmatprep.subr.bf16.mxu0 0
        %424 = vmatpush1.bf16.msra.mxu0 0
        %425 = vmatprep.mubr.bf16.mxu0 0
        %426 = vmatmul.mubr.bf16.gmra.mrb[0].mxu0 %v348
        %v427 = vpop.f32.mrb[0].mxu0
        %v428 = vadd.f32 0.0, %v427
        %v429 = vpop.f32.mrb[0].mxu0
        %v430 = vpop.f32.mrb[0].mxu0
        %v431 = vadd.f32 0.0, %v430
        %v432 = vpop.f32.mrb[0].mxu0
        %433 = vdwg.mxu0
        %v435 = vlaneseq
        %v436 = vshrl.u32 %v435, 7
        %v437 = vsub.s32 0, %v436
        %v438 = vrot.slane %v278, %v437
        %v439 = vlaneseq
        %v440 = vshrl.u32 %v439, 7
        %v441 = vsub.s32 1, %v440
        %v442 = vrot.slane %v278, %v441
        %v443 = vlaneseq
        %v444 = vshrl.u32 %v443, 7
        %v445 = vsub.s32 2, %v444
        %v446 = vrot.slane %v278, %v445
        %v450 = vmul.f32 %v385, %v438
        %v451 = vmul.f32 %v387, %v442
        %v452 = vmul.f32 %v428, %v446
        %v453 = vmul.f32 %v389, %v438
        %v454 = vmul.f32 %v391, %v442
        %v455 = vmul.f32 %v431, %v446
        %v456 = vadd.f32 %v450, %v451
        %vm457 = vcmask 244736
        %v458 = vsel %vm457, %v452, 0.0
        %v459 = vadd.f32 %v456, %v458
        %460 = vadd.xlane.f32.xlu0 %v459
        %v461 = vpop.xlane.xlu0 %460
        %v462 = vadd.f32 %v453, %v454
        %v463 = vsel %vm457, %v455, 0.0
        %v464 = vadd.f32 %v462, %v463
        %465 = vadd.xlane.f32.xlu0 %v464
        %v466 = vpop.xlane.xlu0 %465
        %v467 = vadd.f32 %v461, 0.0
        %v468 = vadd.f32 %v466, 0.0
        %v469 = vmul.f32 %v450, %v385
        %v470 = vmul.f32 %v451, %v387
        %v471 = vmul.f32 %v452, %v428
        %v472 = vmul.f32 %v453, %v389
        %v473 = vmul.f32 %v454, %v391
        %v474 = vmul.f32 %v455, %v431
        %v475 = vadd.f32 %v469, %v470
        %v476 = vsel %vm457, %v471, 0.0
        %v477 = vadd.f32 %v475, %v476
        %478 = vadd.xlane.f32.xlu0 %v477
        %v479 = vpop.xlane.xlu0 %478
        %v480 = vadd.f32 %v472, %v473
        %v481 = vsel %vm457, %v474, 0.0
        %v482 = vadd.f32 %v480, %v481
        %483 = vadd.xlane.f32.xlu0 %v482
        %v484 = vpop.xlane.xlu0 %483
        %v485 = vadd.f32 %v479, 0.0
        %v486 = vadd.f32 %v484, 0.0
        %s487 = scalar_lea.vmem [#allocation5], 8
        %v488 = vld [vmem:[%s487] sm:$0xf]
        %v489 = vld [vmem:[%s487 + $0x4] sm:$0xf]
        %v492 = vunpack.c.l.b16 %v488
        %v493 = vunpack.c.l.b16 %v489
        %v494 = vpack.c.b16 %v493, %v492
        %501 = vrot.lane.b32.xlu0 %v317, 127
        %v502 = vpop.permute.xlu0 %501
        %503 = vrot.lane.b32.xlu0 %v321, 127
        %v504 = vpop.permute.xlu0 %503
        %505 = vrot.lane.b32.xlu0 %v325, 127
        %v506 = vpop.permute.xlu0 %505
        %507 = vrot.lane.b32.xlu0 %v329, 127
        %v508 = vpop.permute.xlu0 %507
        %509 = vrot.lane.b32.xlu0 %v333, 127
        %v510 = vpop.permute.xlu0 %509
        %511 = vrot.lane.b32.xlu0 %v337, 127
        %v512 = vpop.permute.xlu0 %511
        %v513 = vsel %vm293, %v502, %v504
        %v514 = vsel %vm293, %v504, %v506
        %v515 = vsel %vm293, %v508, %v510
        %v516 = vsel %vm293, %v510, %v512
        %v524 = vsel %vm346, %v494, 0
        %526 = vmatprep.subr.bf16.mxu0 %v514
        %527 = vmatpush1.bf16.msra.mxu0 %v513
        %528 = vmatprep.subr.bf16.mxu0 %v516
        %529 = vmatpush1.bf16.msra.mxu0 %v515
        %530 = vmatprep.subr.bf16.mxu0 0
        %531 = vmatpush1.bf16.msra.mxu0 0
        %532 = vmatprep.subr.bf16.mxu0 0
        %533 = vmatpush1.bf16.msra.mxu0 0
        %534 = vmatprep.subr.bf16.mxu0 0
        %535 = vmatpush1.bf16.msra.mxu0 0
        %536 = vmatprep.subr.bf16.mxu0 0
        %537 = vmatpush1.bf16.msra.mxu0 0
        %538 = vmatprep.subr.bf16.mxu0 0
        %539 = vmatpush1.bf16.msra.mxu0 0
        %540 = vmatprep.subr.bf16.mxu0 0
        %541 = vmatpush1.bf16.msra.mxu0 0
        %542 = vmatprep.subr.bf16.mxu0 0
        %543 = vmatpush1.bf16.msra.mxu0 0
        %544 = vmatprep.subr.bf16.mxu0 0
        %545 = vmatpush1.bf16.msra.mxu0 0
        %546 = vmatprep.subr.bf16.mxu0 0
        %547 = vmatpush1.bf16.msra.mxu0 0
        %548 = vmatprep.subr.bf16.mxu0 0
        %549 = vmatpush1.bf16.msra.mxu0 0
        %550 = vmatprep.subr.bf16.mxu0 0
        %551 = vmatpush1.bf16.msra.mxu0 0
        %552 = vmatprep.subr.bf16.mxu0 0
        %553 = vmatpush1.bf16.msra.mxu0 0
        %554 = vmatprep.subr.bf16.mxu0 0
        %555 = vmatpush1.bf16.msra.mxu0 0
        %556 = vmatprep.subr.bf16.mxu0 0
        %557 = vmatpush1.bf16.msra.mxu0 0
        %558 = vmatprep.mubr.bf16.mxu0 0
        %559 = vmatmul.mubr.bf16.gmra.mrb[0].mxu0 %v524
        %v560 = vpop.f32.mrb[0].mxu0
        %v561 = vadd.f32 0.0, %v560
        %v562 = vpop.f32.mrb[0].mxu0
        %v563 = vadd.f32 0.0, %v562
        %v564 = vpop.f32.mrb[0].mxu0
        %v565 = vadd.f32 0.0, %v564
        %v566 = vpop.f32.mrb[0].mxu0
        %v567 = vadd.f32 0.0, %v566
        %568 = vdwg.mxu0
        %569 = vmatprep.subr.bf16.mxu0 0
        %570 = vmatpush1.bf16.msra.mxu0 %v506
        %571 = vmatprep.subr.bf16.mxu0 0
        %572 = vmatpush1.bf16.msra.mxu0 %v512
        %573 = vmatprep.subr.bf16.mxu0 0
        %574 = vmatpush1.bf16.msra.mxu0 0
        %575 = vmatprep.subr.bf16.mxu0 0
        %576 = vmatpush1.bf16.msra.mxu0 0
        %577 = vmatprep.subr.bf16.mxu0 0
        %578 = vmatpush1.bf16.msra.mxu0 0
        %579 = vmatprep.subr.bf16.mxu0 0
        %580 = vmatpush1.bf16.msra.mxu0 0
        %581 = vmatprep.subr.bf16.mxu0 0
        %582 = vmatpush1.bf16.msra.mxu0 0
        %583 = vmatprep.subr.bf16.mxu0 0
        %584 = vmatpush1.bf16.msra.mxu0 0
        %585 = vmatprep.subr.bf16.mxu0 0
        %586 = vmatpush1.bf16.msra.mxu0 0
        %587 = vmatprep.subr.bf16.mxu0 0
        %588 = vmatpush1.bf16.msra.mxu0 0
        %589 = vmatprep.subr.bf16.mxu0 0
        %590 = vmatpush1.bf16.msra.mxu0 0
        %591 = vmatprep.subr.bf16.mxu0 0
        %592 = vmatpush1.bf16.msra.mxu0 0
        %593 = vmatprep.subr.bf16.mxu0 0
        %594 = vmatpush1.bf16.msra.mxu0 0
        %595 = vmatprep.subr.bf16.mxu0 0
        %596 = vmatpush1.bf16.msra.mxu0 0
        %597 = vmatprep.subr.bf16.mxu0 0
        %598 = vmatpush1.bf16.msra.mxu0 0
        %599 = vmatprep.subr.bf16.mxu0 0
        %600 = vmatpush1.bf16.msra.mxu0 0
        %601 = vmatprep.mubr.bf16.mxu0 0
        %602 = vmatmul.mubr.bf16.gmra.mrb[0].mxu0 %v524
        %v603 = vpop.f32.mrb[0].mxu0
        %v604 = vadd.f32 0.0, %v603
        %v605 = vpop.f32.mrb[0].mxu0
        %v606 = vpop.f32.mrb[0].mxu0
        %v607 = vadd.f32 0.0, %v606
        %v608 = vpop.f32.mrb[0].mxu0
        %609 = vdwg.mxu0
        %v610 = vmul.f32 %v561, %v438
        %v611 = vmul.f32 %v563, %v442
        %v612 = vmul.f32 %v604, %v446
        %v613 = vmul.f32 %v565, %v438
        %v614 = vmul.f32 %v567, %v442
        %v615 = vmul.f32 %v607, %v446
        %v616 = vadd.f32 %v610, %v611
        %v617 = vsel %vm457, %v612, 0.0
        %v618 = vadd.f32 %v616, %v617
        %619 = vadd.xlane.f32.xlu0 %v618
        %v620 = vpop.xlane.xlu0 %619
        %v621 = vadd.f32 %v613, %v614
        %v622 = vsel %vm457, %v615, 0.0
        %v623 = vadd.f32 %v621, %v622
        %624 = vadd.xlane.f32.xlu0 %v623
        %v625 = vpop.xlane.xlu0 %624
        %v626 = vadd.f32 %v467, %v620
        %v627 = vadd.f32 %v468, %v625
        %v628 = vmul.f32 %v610, %v561
        %v629 = vmul.f32 %v611, %v563
        %v630 = vmul.f32 %v612, %v604
        %v631 = vmul.f32 %v613, %v565
        %v632 = vmul.f32 %v614, %v567
        %v633 = vmul.f32 %v615, %v607
        %v634 = vadd.f32 %v628, %v629
        %v635 = vsel %vm457, %v630, 0.0
        %v636 = vadd.f32 %v634, %v635
        %637 = vadd.xlane.f32.xlu0 %v636
        %v638 = vpop.xlane.xlu0 %637
        %v639 = vadd.f32 %v631, %v632
        %v640 = vsel %vm457, %v633, 0.0
        %v641 = vadd.f32 %v639, %v640
        %642 = vadd.xlane.f32.xlu0 %v641
        %v643 = vpop.xlane.xlu0 %642
        %v644 = vadd.f32 %v485, %v638
        %v645 = vadd.f32 %v486, %v643
        %s646 = scalar_lea.vmem [#allocation5], 16
        %v647 = vld [vmem:[%s646] sm:$0xf]
        %v648 = vld [vmem:[%s646 + $0x4] sm:$0xf]
        %v651 = vunpack.c.l.b16 %v647
        %v652 = vunpack.c.l.b16 %v648
        %v653 = vpack.c.b16 %v652, %v651
        %654 = vrot.lane.b32.xlu0 %v317, 110
        %v655 = vpop.permute.xlu0 %654
        %656 = vrot.lane.b32.xlu0 %v321, 110
        %v657 = vpop.permute.xlu0 %656
        %658 = vrot.lane.b32.xlu0 %v325, 110
        %v659 = vpop.permute.xlu0 %658
        %660 = vrot.lane.b32.xlu0 %v329, 110
        %v661 = vpop.permute.xlu0 %660
        %662 = vrot.lane.b32.xlu0 %v333, 110
        %v663 = vpop.permute.xlu0 %662
        %664 = vrot.lane.b32.xlu0 %v337, 110
        %v665 = vpop.permute.xlu0 %664
        %v666 = vsel %vm302, %v655, %v657
        %v667 = vsel %vm302, %v657, %v659
        %v668 = vsel %vm302, %v661, %v663
        %v669 = vsel %vm302, %v663, %v665
        %v677 = vsel %vm346, %v653, 0
        %679 = vmatprep.subr.bf16.mxu0 %v667
        %680 = vmatpush1.bf16.msra.mxu0 %v666
        %681 = vmatprep.subr.bf16.mxu0 %v669
        %682 = vmatpush1.bf16.msra.mxu0 %v668
        %683 = vmatprep.subr.bf16.mxu0 0
        %684 = vmatpush1.bf16.msra.mxu0 0
        %685 = vmatprep.subr.bf16.mxu0 0
        %686 = vmatpush1.bf16.msra.mxu0 0
        %687 = vmatprep.subr.bf16.mxu0 0
        %688 = vmatpush1.bf16.msra.mxu0 0
        %689 = vmatprep.subr.bf16.mxu0 0
        %690 = vmatpush1.bf16.msra.mxu0 0
        %691 = vmatprep.subr.bf16.mxu0 0
        %692 = vmatpush1.bf16.msra.mxu0 0
        %693 = vmatprep.subr.bf16.mxu0 0
        %694 = vmatpush1.bf16.msra.mxu0 0
        %695 = vmatprep.subr.bf16.mxu0 0
        %696 = vmatpush1.bf16.msra.mxu0 0
        %697 = vmatprep.subr.bf16.mxu0 0
        %698 = vmatpush1.bf16.msra.mxu0 0
        %699 = vmatprep.subr.bf16.mxu0 0
        %700 = vmatpush1.bf16.msra.mxu0 0
        %701 = vmatprep.subr.bf16.mxu0 0
        %702 = vmatpush1.bf16.msra.mxu0 0
        %703 = vmatprep.subr.bf16.mxu0 0
        %704 = vmatpush1.bf16.msra.mxu0 0
        %705 = vmatprep.subr.bf16.mxu0 0
        %706 = vmatpush1.bf16.msra.mxu0 0
        %707 = vmatprep.subr.bf16.mxu0 0
        %708 = vmatpush1.bf16.msra.mxu0 0
        %709 = vmatprep.subr.bf16.mxu0 0
        %710 = vmatpush1.bf16.msra.mxu0 0
        %711 = vmatprep.mubr.bf16.mxu0 0
        %712 = vmatmul.mubr.bf16.gmra.mrb[0].mxu0 %v677
        %v713 = vpop.f32.mrb[0].mxu0
        %v714 = vadd.f32 0.0, %v713
        %v715 = vpop.f32.mrb[0].mxu0
        %v716 = vadd.f32 0.0, %v715
        %v717 = vpop.f32.mrb[0].mxu0
        %v718 = vadd.f32 0.0, %v717
        %v719 = vpop.f32.mrb[0].mxu0
        %v720 = vadd.f32 0.0, %v719
        %721 = vdwg.mxu0
        %722 = vmatprep.subr.bf16.mxu0 0
        %723 = vmatpush1.bf16.msra.mxu0 %v659
        %724 = vmatprep.subr.bf16.mxu0 0
        %725 = vmatpush1.bf16.msra.mxu0 %v665
        %726 = vmatprep.subr.bf16.mxu0 0
        %727 = vmatpush1.bf16.msra.mxu0 0
        %728 = vmatprep.subr.bf16.mxu0 0
        %729 = vmatpush1.bf16.msra.mxu0 0
        %730 = vmatprep.subr.bf16.mxu0 0
        %731 = vmatpush1.bf16.msra.mxu0 0
        %732 = vmatprep.subr.bf16.mxu0 0
        %733 = vmatpush1.bf16.msra.mxu0 0
        %734 = vmatprep.subr.bf16.mxu0 0
        %735 = vmatpush1.bf16.msra.mxu0 0
        %736 = vmatprep.subr.bf16.mxu0 0
        %737 = vmatpush1.bf16.msra.mxu0 0
        %738 = vmatprep.subr.bf16.mxu0 0
        %739 = vmatpush1.bf16.msra.mxu0 0
        %740 = vmatprep.subr.bf16.mxu0 0
        %741 = vmatpush1.bf16.msra.mxu0 0
        %742 = vmatprep.subr.bf16.mxu0 0
        %743 = vmatpush1.bf16.msra.mxu0 0
        %744 = vmatprep.subr.bf16.mxu0 0
        %745 = vmatpush1.bf16.msra.mxu0 0
        %746 = vmatprep.subr.bf16.mxu0 0
        %747 = vmatpush1.bf16.msra.mxu0 0
        %748 = vmatprep.subr.bf16.mxu0 0
        %749 = vmatpush1.bf16.msra.mxu0 0
        %750 = vmatprep.subr.bf16.mxu0 0
        %751 = vmatpush1.bf16.msra.mxu0 0
        %752 = vmatprep.subr.bf16.mxu0 0
        %753 = vmatpush1.bf16.msra.mxu0 0
        %754 = vmatprep.mubr.bf16.mxu0 0
        %755 = vmatmul.mubr.bf16.gmra.mrb[0].mxu0 %v677
        %v756 = vpop.f32.mrb[0].mxu0
        %v757 = vadd.f32 0.0, %v756
        %v758 = vpop.f32.mrb[0].mxu0
        %v759 = vpop.f32.mrb[0].mxu0
        %v760 = vadd.f32 0.0, %v759
        %v761 = vpop.f32.mrb[0].mxu0
        %762 = vdwg.mxu0
        %v763 = vmul.f32 %v714, %v438
        %v764 = vmul.f32 %v716, %v442
        %v765 = vmul.f32 %v757, %v446
        %v766 = vmul.f32 %v718, %v438
        %v767 = vmul.f32 %v720, %v442
        %v768 = vmul.f32 %v760, %v446
        %v769 = vadd.f32 %v763, %v764
        %v770 = vsel %vm457, %v765, 0.0
        %v771 = vadd.f32 %v769, %v770
        %772 = vadd.xlane.f32.xlu0 %v771
        %v773 = vpop.xlane.xlu0 %772
        %v774 = vadd.f32 %v766, %v767
        %v775 = vsel %vm457, %v768, 0.0
        %v776 = vadd.f32 %v774, %v775
        %777 = vadd.xlane.f32.xlu0 %v776
        %v778 = vpop.xlane.xlu0 %777
        %v779 = vadd.f32 %v626, %v773
        %v780 = vadd.f32 %v627, %v778
        %v781 = vmul.f32 %v763, %v714
        %v782 = vmul.f32 %v764, %v716
        %v783 = vmul.f32 %v765, %v757
        %v784 = vmul.f32 %v766, %v718
        %v785 = vmul.f32 %v767, %v720
        %v786 = vmul.f32 %v768, %v760
        %v787 = vadd.f32 %v781, %v782
        %v788 = vsel %vm457, %v783, 0.0
        %v789 = vadd.f32 %v787, %v788
        %790 = vadd.xlane.f32.xlu0 %v789
        %v791 = vpop.xlane.xlu0 %790
        %v792 = vadd.f32 %v784, %v785
        %v793 = vsel %vm457, %v786, 0.0
        %v794 = vadd.f32 %v792, %v793
        %795 = vadd.xlane.f32.xlu0 %v794
        %v796 = vpop.xlane.xlu0 %795
        %v797 = vadd.f32 %v644, %v791
        %v798 = vadd.f32 %v645, %v796
        %s799 = scalar_lea.vmem [#allocation5], 24
        %v800 = vld [vmem:[%s799] sm:$0xf]
        %v801 = vld [vmem:[%s799 + $0x4] sm:$0xf]
        %v804 = vunpack.c.l.b16 %v800
        %v805 = vunpack.c.l.b16 %v801
        %v806 = vpack.c.b16 %v805, %v804
        %807 = vrot.lane.b32.xlu0 %v317, 109
        %v808 = vpop.permute.xlu0 %807
        %809 = vrot.lane.b32.xlu0 %v321, 109
        %v810 = vpop.permute.xlu0 %809
        %811 = vrot.lane.b32.xlu0 %v325, 109
        %v812 = vpop.permute.xlu0 %811
        %813 = vrot.lane.b32.xlu0 %v329, 109
        %v814 = vpop.permute.xlu0 %813
        %815 = vrot.lane.b32.xlu0 %v333, 109
        %v816 = vpop.permute.xlu0 %815
        %817 = vrot.lane.b32.xlu0 %v337, 109
        %v818 = vpop.permute.xlu0 %817
        %v819 = vsel %vm311, %v808, %v810
        %v820 = vsel %vm311, %v810, %v812
        %v821 = vsel %vm311, %v814, %v816
        %v822 = vsel %vm311, %v816, %v818
        %v830 = vsel %vm346, %v806, 0
        %832 = vmatprep.subr.bf16.mxu0 %v820
        %833 = vmatpush1.bf16.msra.mxu0 %v819
        %834 = vmatprep.subr.bf16.mxu0 %v822
        %835 = vmatpush1.bf16.msra.mxu0 %v821
        %836 = vmatprep.subr.bf16.mxu0 0
        %837 = vmatpush1.bf16.msra.mxu0 0
        %838 = vmatprep.subr.bf16.mxu0 0
        %839 = vmatpush1.bf16.msra.mxu0 0
        %840 = vmatprep.subr.bf16.mxu0 0
        %841 = vmatpush1.bf16.msra.mxu0 0
        %842 = vmatprep.subr.bf16.mxu0 0
        %843 = vmatpush1.bf16.msra.mxu0 0
        %844 = vmatprep.subr.bf16.mxu0 0
        %845 = vmatpush1.bf16.msra.mxu0 0
        %846 = vmatprep.subr.bf16.mxu0 0
        %847 = vmatpush1.bf16.msra.mxu0 0
        %848 = vmatprep.subr.bf16.mxu0 0
        %849 = vmatpush1.bf16.msra.mxu0 0
        %850 = vmatprep.subr.bf16.mxu0 0
        %851 = vmatpush1.bf16.msra.mxu0 0
        %852 = vmatprep.subr.bf16.mxu0 0
        %853 = vmatpush1.bf16.msra.mxu0 0
        %854 = vmatprep.subr.bf16.mxu0 0
        %855 = vmatpush1.bf16.msra.mxu0 0
        %856 = vmatprep.subr.bf16.mxu0 0
        %857 = vmatpush1.bf16.msra.mxu0 0
        %858 = vmatprep.subr.bf16.mxu0 0
        %859 = vmatpush1.bf16.msra.mxu0 0
        %860 = vmatprep.subr.bf16.mxu0 0
        %861 = vmatpush1.bf16.msra.mxu0 0
        %862 = vmatprep.subr.bf16.mxu0 0
        %863 = vmatpush1.bf16.msra.mxu0 0
        %864 = vmatprep.mubr.bf16.mxu0 0
        %865 = vmatmul.mubr.bf16.gmra.mrb[0].mxu0 %v830
        %v866 = vpop.f32.mrb[0].mxu0
        %v867 = vadd.f32 0.0, %v866
        %v868 = vpop.f32.mrb[0].mxu0
        %v869 = vadd.f32 0.0, %v868
        %v870 = vpop.f32.mrb[0].mxu0
        %v871 = vadd.f32 0.0, %v870
        %v872 = vpop.f32.mrb[0].mxu0
        %v873 = vadd.f32 0.0, %v872
        %874 = vdwg.mxu0
        %875 = vmatprep.subr.bf16.mxu0 0
        %876 = vmatpush1.bf16.msra.mxu0 %v812
        %877 = vmatprep.subr.bf16.mxu0 0
        %878 = vmatpush1.bf16.msra.mxu0 %v818
        %879 = vmatprep.subr.bf16.mxu0 0
        %880 = vmatpush1.bf16.msra.mxu0 0
        %881 = vmatprep.subr.bf16.mxu0 0
        %882 = vmatpush1.bf16.msra.mxu0 0
        %883 = vmatprep.subr.bf16.mxu0 0
        %884 = vmatpush1.bf16.msra.mxu0 0
        %885 = vmatprep.subr.bf16.mxu0 0
        %886 = vmatpush1.bf16.msra.mxu0 0
        %887 = vmatprep.subr.bf16.mxu0 0
        %888 = vmatpush1.bf16.msra.mxu0 0
        %889 = vmatprep.subr.bf16.mxu0 0
        %890 = vmatpush1.bf16.msra.mxu0 0
        %891 = vmatprep.subr.bf16.mxu0 0
        %892 = vmatpush1.bf16.msra.mxu0 0
        %893 = vmatprep.subr.bf16.mxu0 0
        %894 = vmatpush1.bf16.msra.mxu0 0
        %895 = vmatprep.subr.bf16.mxu0 0
        %896 = vmatpush1.bf16.msra.mxu0 0
        %897 = vmatprep.subr.bf16.mxu0 0
        %898 = vmatpush1.bf16.msra.mxu0 0
        %899 = vmatprep.subr.bf16.mxu0 0
        %900 = vmatpush1.bf16.msra.mxu0 0
        %901 = vmatprep.subr.bf16.mxu0 0
        %902 = vmatpush1.bf16.msra.mxu0 0
        %903 = vmatprep.subr.bf16.mxu0 0
        %904 = vmatpush1.bf16.msra.mxu0 0
        %905 = vmatprep.subr.bf16.mxu0 0
        %906 = vmatpush1.bf16.msra.mxu0 0
        %907 = vmatprep.mubr.bf16.mxu0 0
        %908 = vmatmul.mubr.bf16.gmra.mrb[0].mxu0 %v830
        %v909 = vpop.f32.mrb[0].mxu0
        %v910 = vadd.f32 0.0, %v909
        %v911 = vpop.f32.mrb[0].mxu0
        %v912 = vpop.f32.mrb[0].mxu0
        %v913 = vadd.f32 0.0, %v912
        %v914 = vpop.f32.mrb[0].mxu0
        %915 = vdwg.mxu0
        %v916 = vmul.f32 %v867, %v438
        %v917 = vmul.f32 %v869, %v442
        %v918 = vmul.f32 %v910, %v446
        %v919 = vmul.f32 %v871, %v438
        %v920 = vmul.f32 %v873, %v442
        %v921 = vmul.f32 %v913, %v446
        %v922 = vadd.f32 %v916, %v917
        %v923 = vsel %vm457, %v918, 0.0
        %v924 = vadd.f32 %v922, %v923
        %925 = vadd.xlane.f32.xlu0 %v924
        %v926 = vpop.xlane.xlu0 %925
        %v927 = vadd.f32 %v919, %v920
        %v928 = vsel %vm457, %v921, 0.0
        %v929 = vadd.f32 %v927, %v928
        %930 = vadd.xlane.f32.xlu0 %v929
        %v931 = vpop.xlane.xlu0 %930
        %v932 = vadd.f32 %v779, %v926
        %v933 = vadd.f32 %v780, %v931
        %v934 = vmul.f32 %v916, %v867
        %v935 = vmul.f32 %v917, %v869
        %v936 = vmul.f32 %v918, %v910
        %v937 = vmul.f32 %v919, %v871
        %v938 = vmul.f32 %v920, %v873
        %v939 = vmul.f32 %v921, %v913
        %v940 = vadd.f32 %v934, %v935
        %v941 = vsel %vm457, %v936, 0.0
        %v942 = vadd.f32 %v940, %v941
        %943 = vadd.xlane.f32.xlu0 %v942
        %v944 = vpop.xlane.xlu0 %943
        %v945 = vadd.f32 %v937, %v938
        %v946 = vsel %vm457, %v939, 0.0
        %v947 = vadd.f32 %v945, %v946
        %948 = vadd.xlane.f32.xlu0 %v947
        %v949 = vpop.xlane.xlu0 %948
        %v950 = vadd.f32 %v797, %v944
        %v951 = vadd.f32 %v798, %v949
        %v952 = vmul.f32 %v932, 0.0009765625
        %v953 = vmul.f32 %v933, 0.0009765625
        %v954 = vmul.f32 %v950, 0.0009765625
        %v955 = vmul.f32 %v951, 0.0009765625
        %v956 = vmul.f32 %v952, %v952
        %v957 = vmul.f32 %v953, %v953
        %v958 = vsub.f32 %v954, %v956
        %v959 = vsub.f32 %v955, %v957
        %v960 = vmax.f32 %v958, 0.0
        %v961 = vmax.f32 %v959, 0.0
        %v962 = vadd.f32 %v960, 1e-05
        %v963 = vadd.f32 %v961, 1e-05
        %v964 = vrsqrt.pop %v962
        %v965 = vrsqrt.pop %v963
        %v966 = vld [vmem:[%s272] sm:$0xff]
        %v967 = vld [vmem:[%s272 + $0x8] sm:$0xff]
        %v968 = vmul.f32 %v966, %v964
        %v969 = vmul.f32 %v967, %v965
        %v970 = vmul.f32 %v952, %v968
        %v971 = vmul.f32 %v953, %v969
        %974 = vrot.lane.b32.xlu0 %v970, 1
        %v975 = vpop.permute.xlu0 %974
        %976 = vrot.lane.b32.xlu0 %v971, 1
        %v977 = vpop.permute.xlu0 %976
        %v980 = vsub.f32 %v966, %v975
        %v981 = vsub.f32 %v967, %v977
        %983 = vset.pattern.permute.xlu0 0
        %984 = vperm.xlu0 %983, %v968
        %v985 = vpop.permute.xlu0 %984
        %988 = vset.pattern.permute.xlu0 0
        %989 = vperm.xlu0 %988, %v969
        %v990 = vpop.permute.xlu0 %989
        %v992 = vmul.f32 %v385, %v985
        %v993 = vmul.f32 %v387, %v985
        %v994 = vmul.f32 %v428, %v985
        %v995 = vmul.f32 %v389, %v990
        %v996 = vmul.f32 %v391, %v990
        %v997 = vmul.f32 %v431, %v990
        %999 = vset.pattern.permute.xlu0 1
        %1000 = vperm.xlu0 %999, %v980
        %v1001 = vpop.permute.xlu0 %1000
        %1004 = vset.pattern.permute.xlu0 1
        %1005 = vperm.xlu0 %1004, %v981
        %v1006 = vpop.permute.xlu0 %1005
        %v1008 = vadd.f32 %v992, %v1001
        %v1009 = vadd.f32 %v993, %v1001
        %v1010 = vadd.f32 %v994, %v1001
        %v1011 = vadd.f32 %v995, %v1006
        %v1012 = vadd.f32 %v996, %v1006
        %v1013 = vadd.f32 %v997, %v1006
        %v1014 = vmax.f32 %v1008, 0.0
        %v1015 = vmax.f32 %v1009, 0.0
        %v1016 = vmax.f32 %v1010, 0.0
        %v1017 = vmax.f32 %v1011, 0.0
        %v1018 = vmax.f32 %v1012, 0.0
        %v1019 = vmax.f32 %v1013, 0.0
        %v1020 = vpack.c.bf16 %v1017, %v1014
        %v1021 = vpack.c.bf16 %v1018, %v1015
        %v1022 = vpack.c.bf16 %v1019, %v1016
        %v1026 = vunpack.c.l.b16 %v1020
        %v1027 = vunpack.c.l.b16 %v1021
        %v1028 = vunpack.c.l.b16 %v1022
        %v1029 = vunpack.c.h.b16 %v1020
        %v1030 = vunpack.c.h.b16 %v1021
        %v1031 = vunpack.c.h.b16 %v1022
        %v1032 = vpack.c.b16 %v1027, %v1026
        %v1033 = vpack.c.b16 %v1028, %v1028
        %v1034 = vpack.c.b16 %v1030, %v1029
        %v1035 = vpack.c.b16 %v1031, %v1031
        %1040 = vst [vmem:[%s266] sm:$0xff] %v1032
        %vm1041 = vcmask 240640
        %1042 = vst.msk [vmem:[%s266 + $0x8] sm:$0xf] %vm1041, %v1033
        %1043 = vst [vmem:[%s266 + $0xc] sm:$0xff] %v1034
        %1044 = vst.msk [vmem:[%s266 + $0x14] sm:$0xf] %vm1041, %v1035
        %v1045 = vmul.f32 %v561, %v985
        %v1046 = vmul.f32 %v563, %v985
        %v1047 = vmul.f32 %v604, %v985
        %v1048 = vmul.f32 %v565, %v990
        %v1049 = vmul.f32 %v567, %v990
        %v1050 = vmul.f32 %v607, %v990
        %v1051 = vadd.f32 %v1045, %v1001
        %v1052 = vadd.f32 %v1046, %v1001
        %v1053 = vadd.f32 %v1047, %v1001
        %v1054 = vadd.f32 %v1048, %v1006
        %v1055 = vadd.f32 %v1049, %v1006
        %v1056 = vadd.f32 %v1050, %v1006
        %v1057 = vmax.f32 %v1051, 0.0
        %v1058 = vmax.f32 %v1052, 0.0
        %v1059 = vmax.f32 %v1053, 0.0
        %v1060 = vmax.f32 %v1054, 0.0
        %v1061 = vmax.f32 %v1055, 0.0
        %v1062 = vmax.f32 %v1056, 0.0
        %v1063 = vpack.c.bf16 %v1060, %v1057
        %v1064 = vpack.c.bf16 %v1061, %v1058
        %v1065 = vpack.c.bf16 %v1062, %v1059
        %v1069 = vunpack.c.l.b16 %v1063
        %v1070 = vunpack.c.l.b16 %v1064
        %v1071 = vunpack.c.l.b16 %v1065
        %v1072 = vunpack.c.h.b16 %v1063
        %v1073 = vunpack.c.h.b16 %v1064
        %v1074 = vunpack.c.h.b16 %v1065
        %v1075 = vpack.c.b16 %v1070, %v1069
        %v1076 = vpack.c.b16 %v1071, %v1071
        %v1077 = vpack.c.b16 %v1073, %v1072
        %v1078 = vpack.c.b16 %v1074, %v1074
        %s1083 = scalar_lea.vmem %s266, 24 [#allocation7]
        %1084 = vst [vmem:[%s1083] sm:$0xff] %v1075
        %1085 = vst.msk [vmem:[%s1083 + $0x8] sm:$0xf] %vm1041, %v1076
        %1086 = vst [vmem:[%s1083 + $0xc] sm:$0xff] %v1077
        %1087 = vst.msk [vmem:[%s1083 + $0x14] sm:$0xf] %vm1041, %v1078
        %v1088 = vmul.f32 %v714, %v985
        %v1089 = vmul.f32 %v716, %v985
        %v1090 = vmul.f32 %v757, %v985
        %v1091 = vmul.f32 %v718, %v990
        %v1092 = vmul.f32 %v720, %v990
        %v1093 = vmul.f32 %v760, %v990
        %v1094 = vadd.f32 %v1088, %v1001
        %v1095 = vadd.f32 %v1089, %v1001
        %v1096 = vadd.f32 %v1090, %v1001
        %v1097 = vadd.f32 %v1091, %v1006
        %v1098 = vadd.f32 %v1092, %v1006
        %v1099 = vadd.f32 %v1093, %v1006
        %v1100 = vmax.f32 %v1094, 0.0
        %v1101 = vmax.f32 %v1095, 0.0
        %v1102 = vmax.f32 %v1096, 0.0
        %v1103 = vmax.f32 %v1097, 0.0
        %v1104 = vmax.f32 %v1098, 0.0
        %v1105 = vmax.f32 %v1099, 0.0
        %v1106 = vpack.c.bf16 %v1103, %v1100
        %v1107 = vpack.c.bf16 %v1104, %v1101
        %v1108 = vpack.c.bf16 %v1105, %v1102
        %v1112 = vunpack.c.l.b16 %v1106
        %v1113 = vunpack.c.l.b16 %v1107
        %v1114 = vunpack.c.l.b16 %v1108
        %v1115 = vunpack.c.h.b16 %v1106
        %v1116 = vunpack.c.h.b16 %v1107
        %v1117 = vunpack.c.h.b16 %v1108
        %v1118 = vpack.c.b16 %v1113, %v1112
        %v1119 = vpack.c.b16 %v1114, %v1114
        %v1120 = vpack.c.b16 %v1116, %v1115
        %v1121 = vpack.c.b16 %v1117, %v1117
        %s1126 = scalar_lea.vmem %s266, 48 [#allocation7]
        %1127 = vst [vmem:[%s1126] sm:$0xff] %v1118
        %1128 = vst.msk [vmem:[%s1126 + $0x8] sm:$0xf] %vm1041, %v1119
        %1129 = vst [vmem:[%s1126 + $0xc] sm:$0xff] %v1120
        %1130 = vst.msk [vmem:[%s1126 + $0x14] sm:$0xf] %vm1041, %v1121
        %v1131 = vmul.f32 %v867, %v985
        %v1132 = vmul.f32 %v869, %v985
        %v1133 = vmul.f32 %v910, %v985
        %v1134 = vmul.f32 %v871, %v990
        %v1135 = vmul.f32 %v873, %v990
        %v1136 = vmul.f32 %v913, %v990
        %v1137 = vadd.f32 %v1131, %v1001
        %v1138 = vadd.f32 %v1132, %v1001
        %v1139 = vadd.f32 %v1133, %v1001
        %v1140 = vadd.f32 %v1134, %v1006
        %v1141 = vadd.f32 %v1135, %v1006
        %v1142 = vadd.f32 %v1136, %v1006
        %v1143 = vmax.f32 %v1137, 0.0
        %v1144 = vmax.f32 %v1138, 0.0
        %v1145 = vmax.f32 %v1139, 0.0
        %v1146 = vmax.f32 %v1140, 0.0
        %v1147 = vmax.f32 %v1141, 0.0
        %v1148 = vmax.f32 %v1142, 0.0
        %v1149 = vpack.c.bf16 %v1146, %v1143
        %v1150 = vpack.c.bf16 %v1147, %v1144
        %v1151 = vpack.c.bf16 %v1148, %v1145
        %v1155 = vunpack.c.l.b16 %v1149
        %v1156 = vunpack.c.l.b16 %v1150
        %v1157 = vunpack.c.l.b16 %v1151
        %v1158 = vunpack.c.h.b16 %v1149
        %v1159 = vunpack.c.h.b16 %v1150
        %v1160 = vunpack.c.h.b16 %v1151
        %v1161 = vpack.c.b16 %v1156, %v1155
        %v1162 = vpack.c.b16 %v1157, %v1157
        %v1163 = vpack.c.b16 %v1159, %v1158
        %v1164 = vpack.c.b16 %v1160, %v1160
        %s1169 = scalar_lea.vmem %s266, 72 [#allocation7]
        %1170 = vst [vmem:[%s1169] sm:$0xff] %v1161
        %1171 = vst.msk [vmem:[%s1169 + $0x8] sm:$0xf] %vm1041, %v1162
        %1172 = vst [vmem:[%s1169 + $0xc] sm:$0xff] %v1163
        %1173 = vst.msk [vmem:[%s1169 + $0x14] sm:$0xf] %vm1041, %v1164
        %s1174 = sand.u32 %s143, 1
        %s1175 = scalar_lea.sflag [#allocation4], %s1174
        %s1176 = sand.u32 %s143, 1
        %s1177 = smul.addr %s1176, 96
        %s1178 = scalar_lea.vmem [#allocation7], %s1177
        // Predicated region
        $region45: #{tpu_custom_call.1} parent=35 // pred_check
          %p1179 = pneg %p153
        $region46: #{tpu_custom_call.1} parent=35 // pred_check_branch
          %1181 = sbr.rel (%p1179) target = $region48
        $region47: #{tpu_custom_call.1} parent=35 // pred_region
          %s1182 = smul.u32 2, %s27
          %s1184 = ssub.s32 1536, 1536
          %1185 = vsyncadd %s1175, %s1184
          %s1186 = smul.addr %s1182, 3
          %s1187 = smul.addr %s26, 24
          %s1188 = sadd.s32 %s1186, %s1187
          %s1189 = smul.addr %s1188, 64
          %s1190 = scalar_lea.hbm %s4, %s1189
          %s1191 = sshll.u32 %s1178, 4
          %s1192 = int_to_ptr.vmem [resolvable:$true] %s1191
          %1197 = dma.vmem_to_hbm [thread:$0]  %s1192, 1536, %s1190, %s1175, 192, 192, 12
        $region48: #{tpu_custom_call.1} parent=35 // pred_fallthru
          _
      $region36: #{tpu_custom_call.1} parent=5 // pred_fallthru
        _
      %p1198 = scmp.le.s32.totalorder 2, %s17
      // Predicated region
      $region49: #{tpu_custom_call.1} parent=5 // pred_check
        %p1199 = pneg %p1198
      $region50: #{tpu_custom_call.1} parent=5 // pred_check_branch
        %1201 = sbr.rel (%p1199) target = $region52
      $region51: #{tpu_custom_call.1} parent=5 // pred_region
        %s1202 = ssub.s32 %s17, 2
        // Predicated region
        $region53: #{tpu_custom_call.1} parent=51 // pred_check
          %p1203 = pneg %p159
        $region54: #{tpu_custom_call.1} parent=51 // pred_check_branch
          %1205 = sbr.rel (%p1203) target = $region56
        $region55: #{tpu_custom_call.1} parent=51 // pred_region
          %s1206 = sand.u32 %s144, 1
          %s1207 = scalar_lea.sflag [#allocation4], %s1206
          %s1208 = sand.u32 %s144, 1
          %s1209 = smul.addr %s1208, 96
          %s1210 = scalar_lea.vmem [#allocation7], %s1209
          %1211 = dma.done %s1207, 1536
        $region56: #{tpu_custom_call.1} parent=51 // pred_fallthru
          _
      $region52: #{tpu_custom_call.1} parent=5 // pred_fallthru
        _
    $region6: #{tpu_custom_call.1} parent=1 // loop_footer
      %s21 = sadd.s32 1, %s17
    $region7: #{tpu_custom_call.1} parent=1 // loop_footer_branch
      %16 = sbr.rel target = $region3
    $region8: #{tpu_custom_call.1} parent=1 // loop_exit
      _
    %1212 = vsyncpa [#allocation3], 1
    %s1213 = scalar_lea.sflag [#allocation3], 1
    %1214 = vsyncpa %s1213, 1
    %1215 = vsyncpa [#allocation6], 1
    %1216 = vsyncpa [#allocation4], 1
    %s1217 = scalar_lea.sflag [#allocation4], 1
    %1218 = vsyncpa %s1217, 1

</llo_original>
